<compile_context>
chip_gen: v5e
topology: v5e:2x2
jax: 0.10.0
libtpu: 0.0.40
codegen_flags: <defaults>
</compile_context>

<pallas_src>
import jax
import jax.numpy as jnp
from jax.experimental import pallas as pl
from jax.experimental.pallas import tpu as pltpu


def _round_up(x, m):
    return ((x + m - 1) // m) * m


def icm_kernel(stk_ref, onehot_ref,
               w_enc_ref, b_enc_ref,
               w_inv_o_ref, w_inv_n_ref, b_inv_ref,
               w_fwd_e_ref, w_fwd_a_ref, b_fwd_ref,
               probs_ref, pred_ref):
    # stk_ref: (2, TB, obs_dim) -- obs tile stacked with the matching next_obs tile.
    two, tb, d = stk_ref.shape
    stk = stk_ref[...].reshape(two * tb, d)

    # Fused encoder: a single MXU weight-push of w_enc serves obs and next_obs.
    enc = jnp.dot(stk, w_enc_ref[...], preferred_element_type=jnp.float32) + b_enc_ref[...]
    enc_obs = enc[:tb]
    enc_nobs = enc[tb:]

    # Inverse model: Linear(2E -> A) on hstack([enc_obs, enc_nobs]) as split matmuls
    # (concat([a,b]) @ W == a @ W_top + b @ W_bot), then softmax over features.
    # Padded logit columns carry bias -1e30 so they softmax to exactly 0.
    logits = (jnp.dot(enc_obs, w_inv_o_ref[...], preferred_element_type=jnp.float32)
              + jnp.dot(enc_nobs, w_inv_n_ref[...], preferred_element_type=jnp.float32)
              + b_inv_ref[...])
    m = jnp.max(logits, axis=1, keepdims=True)
    e = jnp.exp(logits - m)
    denom = jnp.sum(e, axis=1, keepdims=True)
    probs_ref[...] = e * pl.reciprocal(denom, approx=True)

    # Forward model: Linear(E+A -> E) on hstack([enc_obs, one_hot(action)]).
    pred_ref[...] = (jnp.dot(enc_obs, w_fwd_e_ref[...], preferred_element_type=jnp.float32)
                     + jnp.dot(onehot_ref[...], w_fwd_a_ref[...], preferred_element_type=jnp.float32)
                     + b_fwd_ref[...])


def icm_forward(obs, next_obs, action_idx, params, *, block_b=256):
    """obs/next_obs: [B, obs_dim] f32; action_idx: [B] int32.
    Returns (predicted_agent_action [B,A], predicted_encoded_next_obs [B,E])."""
    B, obs_dim = obs.shape
    E = params["w_enc"].shape[1]
    A = params["b_inv"].shape[1]
    EP = _round_up(E, 128)            # lane-dense encoded width
    AP = _round_up(A, 128)            # lane-dense action width

    TB = min(block_b, _round_up(B, 8))   # batch tile (multiple of 8 sublanes)
    Bp = _round_up(B, TB)                # padded batch
    nt = Bp // TB

    def pad_rows(x):
        return jnp.pad(x, ((0, Bp - B), (0, 0)))

    obs_p = pad_rows(obs.astype(jnp.float32))
    nobs_p = pad_rows(next_obs.astype(jnp.float32))
    stacked = jnp.stack([obs_p, nobs_p], axis=0)                          # [2, Bp, obs_dim]
    onehot = pad_rows(jax.nn.one_hot(action_idx, A, dtype=jnp.float32))   # [Bp, A]

    # Lane-dense padded parameters (zero pads; softmax bias pad = -1e30).
    w_enc = jnp.pad(params["w_enc"], ((0, 0), (0, EP - E)))
    b_enc = jnp.pad(params["b_enc"], ((0, 0), (0, EP - E)))
    w_inv_o = jnp.pad(params["w_inv_o"], ((0, EP - E), (0, AP - A)))
    w_inv_n = jnp.pad(params["w_inv_n"], ((0, EP - E), (0, AP - A)))
    b_inv = jnp.pad(params["b_inv"], ((0, 0), (0, AP - A)), constant_values=-1e30)
    w_fwd_e = jnp.pad(params["w_fwd_e"], ((0, EP - E), (0, EP - E)))
    w_fwd_a = jnp.pad(params["w_fwd_a"], ((0, 0), (0, EP - E)))
    b_fwd = jnp.pad(params["b_fwd"], ((0, 0), (0, EP - E)))

    # Weights/biases: constant index_map -> DMA'd once, VMEM-resident over the grid.
    const2d = lambda shape: pl.BlockSpec(shape, lambda i: (0, 0))

    in_specs = [
        pl.BlockSpec((2, TB, obs_dim), lambda i: (0, i, 0)),   # stacked obs/next_obs tile
        pl.BlockSpec((TB, A), lambda i: (i, 0)),               # one-hot actions tile
        const2d((obs_dim, EP)),                                # w_enc
        const2d((1, EP)),                                      # b_enc
        const2d((EP, AP)),                                     # w_inv (obs half)
        const2d((EP, AP)),                                     # w_inv (next_obs half)
        const2d((1, AP)),                                      # b_inv
        const2d((EP, EP)),                                     # w_fwd (enc half)
        const2d((A, EP)),                                      # w_fwd (action half)
        const2d((1, EP)),                                      # b_fwd
    ]
    out_specs = (
        pl.BlockSpec((TB, AP), lambda i: (i, 0)),
        pl.BlockSpec((TB, EP), lambda i: (i, 0)),
    )

    flops = 2 * Bp * (2 * obs_dim * EP + 2 * EP * AP + EP * EP + A * EP)
    bytes_accessed = 4 * (2 * Bp * obs_dim + Bp * A
                          + obs_dim * EP + 2 * EP * AP + EP * EP + A * EP
                          + 3 * EP + AP + Bp * AP + Bp * EP)
    cost = pl.CostEstimate(flops=flops,
                           transcendentals=Bp * (AP + 1),
                           bytes_accessed=bytes_accessed)

    probs_p, pred_p = pl.pallas_call(
        icm_kernel,
        out_shape=(jax.ShapeDtypeStruct((Bp, AP), jnp.float32),
                   jax.ShapeDtypeStruct((Bp, EP), jnp.float32)),
        grid_spec=pltpu.PrefetchScalarGridSpec(
            num_scalar_prefetch=0,
            grid=(nt,),
            in_specs=in_specs,
            out_specs=out_specs),
        compiler_params=pltpu.CompilerParams(
            dimension_semantics=("parallel",)),
        cost_estimate=cost,
    )(stacked, onehot, w_enc, b_enc, w_inv_o, w_inv_n, b_inv,
      w_fwd_e, w_fwd_a, b_fwd)

    return probs_p[:B, :A], pred_p[:B, :E]


def init_params(key, obs_dim, encoded_dim, action_dim):
    """PyTorch-style uniform(-1/sqrt(fan_in), 1/sqrt(fan_in)) init, deterministic."""
    ks = jax.random.split(key, 6)

    def lin(kw, kb, fan_in, fan_out):
        bound = 1.0 / jnp.sqrt(jnp.float32(fan_in))
        w = jax.random.uniform(kw, (fan_in, fan_out), jnp.float32, -bound, bound)
        b = jax.random.uniform(kb, (1, fan_out), jnp.float32, -bound, bound)
        return w, b

    w_enc, b_enc = lin(ks[0], ks[1], obs_dim, encoded_dim)
    w_inv, b_inv = lin(ks[2], ks[3], 2 * encoded_dim, action_dim)
    w_fwd, b_fwd = lin(ks[4], ks[5], encoded_dim + action_dim, encoded_dim)
    return {
        "w_enc": w_enc, "b_enc": b_enc,
        "w_inv_o": w_inv[:encoded_dim], "w_inv_n": w_inv[encoded_dim:], "b_inv": b_inv,
        "w_fwd_e": w_fwd[:encoded_dim], "w_fwd_a": w_fwd[encoded_dim:], "b_fwd": b_fwd,
    }


def icm_reference(obs, next_obs, action_idx, params):
    """Plain-JAX reference mirroring the PyTorch forward()."""
    enc = lambda x: x @ params["w_enc"] + params["b_enc"]
    e_o, e_n = enc(obs), enc(next_obs)
    logits = jnp.hstack([e_o, e_n]) @ jnp.concatenate(
        [params["w_inv_o"], params["w_inv_n"]], axis=0) + params["b_inv"]
    probs = jax.nn.softmax(logits, axis=1)
    A = params["b_inv"].shape[1]
    onehot = jax.nn.one_hot(action_idx, A, dtype=jnp.float32)
    pred = jnp.hstack([e_o, onehot]) @ jnp.concatenate(
        [params["w_fwd_e"], params["w_fwd_a"]], axis=0) + params["b_fwd"]
    return probs, pred


if __name__ == "__main__":
    B, OBS_DIM, ENC_DIM, ACT_DIM = 8, 32, 32, 8

    key = jax.random.PRNGKey(0)
    k_obs, k_nobs, k_act, k_par = jax.random.split(key, 4)
    obs = jax.random.normal(k_obs, (B, OBS_DIM), jnp.float32)
    next_obs = jax.random.normal(k_nobs, (B, OBS_DIM), jnp.float32)
    action = jax.random.randint(k_act, (B,), 0, ACT_DIM, jnp.int32)
    params = init_params(k_par, OBS_DIM, ENC_DIM, ACT_DIM)

    probs, pred = icm_forward(obs, next_obs, action, params)
    jax.block_until_ready((probs, pred))

    ref_probs, ref_pred = icm_reference(obs, next_obs, action, params)
    assert probs.shape == (B, ACT_DIM)
    assert pred.shape == (B, ENC_DIM)
    # probs tolerance is looser because of the approximate (EUP) reciprocal.
    assert jnp.allclose(probs, ref_probs, atol=2e-3, rtol=2e-3)
    assert jnp.allclose(pred, ref_pred, atol=1e-5, rtol=1e-5)

    # Second configuration: exercises the batch grid (3 tiles) and batch padding.
    B2 = 40
    k2 = jax.random.split(key, 3)
    obs2 = jax.random.normal(k2[0], (B2, OBS_DIM), jnp.float32)
    nobs2 = jax.random.normal(k2[1], (B2, OBS_DIM), jnp.float32)
    act2 = jax.random.randint(k2[2], (B2,), 0, ACT_DIM, jnp.int32)
    probs2, pred2 = icm_forward(obs2, nobs2, act2, params, block_b=16)
    jax.block_until_ready((probs2, pred2))
    rp2, rd2 = icm_reference(obs2, nobs2, act2, params)
    assert jnp.allclose(probs2, rp2, atol=2e-3, rtol=2e-3)
    assert jnp.allclose(pred2, rd2, atol=1e-5, rtol=1e-5)

    print("KERNEL_OK")
</pallas_src>

<mosaic_0001>
module attributes {stable_mosaic.version = 11 : i64} {
  func.func @icm_kernel(%arg0: i32, %arg1: memref<2x8x32xf32, #tpu.memory_space<vmem>>, %arg2: memref<8x8xf32, #tpu.memory_space<vmem>>, %arg3: memref<32x128xf32, #tpu.memory_space<vmem>>, %arg4: memref<1x128xf32, #tpu.memory_space<vmem>>, %arg5: memref<128x128xf32, #tpu.memory_space<vmem>>, %arg6: memref<128x128xf32, #tpu.memory_space<vmem>>, %arg7: memref<1x128xf32, #tpu.memory_space<vmem>>, %arg8: memref<128x128xf32, #tpu.memory_space<vmem>>, %arg9: memref<8x128xf32, #tpu.memory_space<vmem>>, %arg10: memref<1x128xf32, #tpu.memory_space<vmem>>, %arg11: memref<8x128xf32, #tpu.memory_space<vmem>>, %arg12: memref<8x128xf32, #tpu.memory_space<vmem>>) attributes {dimension_semantics = [#tpu.dimension_semantics<parallel>], iteration_bounds = array<i64: 1>, scalar_prefetch = 0 : i64, scratch_operands = 0 : i64, tpu.core_type = #tpu.core_type<tc>, window_params = [{transform_indices = @transform_0, window_bounds = array<i64: 2, 8, 32>}, {transform_indices = @transform_1, window_bounds = array<i64: 8, 8>}, {pipeline_mode = #tpu.pipeline_mode<synchronous>, transform_indices = @transform_2, window_bounds = array<i64: 32, 128>}, {pipeline_mode = #tpu.pipeline_mode<synchronous>, transform_indices = @transform_3, window_bounds = array<i64: 1, 128>}, {pipeline_mode = #tpu.pipeline_mode<synchronous>, transform_indices = @transform_4, window_bounds = array<i64: 128, 128>}, {pipeline_mode = #tpu.pipeline_mode<synchronous>, transform_indices = @transform_5, window_bounds = array<i64: 128, 128>}, {pipeline_mode = #tpu.pipeline_mode<synchronous>, transform_indices = @transform_6, window_bounds = array<i64: 1, 128>}, {pipeline_mode = #tpu.pipeline_mode<synchronous>, transform_indices = @transform_7, window_bounds = array<i64: 128, 128>}, {pipeline_mode = #tpu.pipeline_mode<synchronous>, transform_indices = @transform_8, window_bounds = array<i64: 8, 128>}, {pipeline_mode = #tpu.pipeline_mode<synchronous>, transform_indices = @transform_9, window_bounds = array<i64: 1, 128>}, {transform_indices = @transform_10, window_bounds = array<i64: 8, 128>}, {transform_indices = @transform_11, window_bounds = array<i64: 8, 128>}]} {
    %c0 = arith.constant 0 : index
    %c0_0 = arith.constant 0 : index
    %c0_1 = arith.constant 0 : index
    %0 = vector.load %arg1[%c0, %c0_0, %c0_1] : memref<2x8x32xf32, #tpu.memory_space<vmem>>, vector<2x8x32xf32>
    %1 = vector.shape_cast %0 : vector<2x8x32xf32> to vector<16x32xf32>
    %c0_2 = arith.constant 0 : index
    %c0_3 = arith.constant 0 : index
    %2 = vector.load %arg3[%c0_2, %c0_3] : memref<32x128xf32, #tpu.memory_space<vmem>>, vector<32x128xf32>
    %cst = arith.constant dense<0.000000e+00> : vector<16x128xf32>
    %3 = tpu.matmul %1, %2, %cst {dimension_numbers = #tpu.dot_dimension_numbers<[1], [0], [0], [1], [0, 0, 1, 1], [], []>} : vector<16x32xf32>, vector<32x128xf32>, vector<16x128xf32> -> vector<16x128xf32>
    %c0_4 = arith.constant 0 : index
    %c0_5 = arith.constant 0 : index
    %4 = vector.load %arg4[%c0_4, %c0_5] : memref<1x128xf32, #tpu.memory_space<vmem>>, vector<1x128xf32>
    %5 = vector.broadcast %4 : vector<1x128xf32> to vector<16x128xf32>
    %6 = arith.addf %3, %5 : vector<16x128xf32>
    %7 = vector.extract_strided_slice %6 {offsets = [0, 0], sizes = [8, 128], strides = [1, 1]} : vector<16x128xf32> to vector<8x128xf32>
    %8 = vector.extract_strided_slice %6 {offsets = [8, 0], sizes = [8, 128], strides = [1, 1]} : vector<16x128xf32> to vector<8x128xf32>
    %c0_6 = arith.constant 0 : index
    %c0_7 = arith.constant 0 : index
    %9 = vector.load %arg5[%c0_6, %c0_7] : memref<128x128xf32, #tpu.memory_space<vmem>>, vector<128x128xf32>
    %cst_8 = arith.constant dense<0.000000e+00> : vector<8x128xf32>
    %10 = tpu.matmul %7, %9, %cst_8 {dimension_numbers = #tpu.dot_dimension_numbers<[1], [0], [0], [1], [0, 0, 1, 1], [], []>} : vector<8x128xf32>, vector<128x128xf32>, vector<8x128xf32> -> vector<8x128xf32>
    %c0_9 = arith.constant 0 : index
    %c0_10 = arith.constant 0 : index
    %11 = vector.load %arg6[%c0_9, %c0_10] : memref<128x128xf32, #tpu.memory_space<vmem>>, vector<128x128xf32>
    %cst_11 = arith.constant dense<0.000000e+00> : vector<8x128xf32>
    %12 = tpu.matmul %8, %11, %cst_11 {dimension_numbers = #tpu.dot_dimension_numbers<[1], [0], [0], [1], [0, 0, 1, 1], [], []>} : vector<8x128xf32>, vector<128x128xf32>, vector<8x128xf32> -> vector<8x128xf32>
    %13 = arith.addf %10, %12 : vector<8x128xf32>
    %c0_12 = arith.constant 0 : index
    %c0_13 = arith.constant 0 : index
    %14 = vector.load %arg7[%c0_12, %c0_13] : memref<1x128xf32, #tpu.memory_space<vmem>>, vector<1x128xf32>
    %15 = vector.broadcast %14 : vector<1x128xf32> to vector<8x128xf32>
    %16 = arith.addf %13, %15 : vector<8x128xf32>
    %cst_14 = arith.constant dense<0xFF800000> : vector<8xf32>
    %17 = vector.multi_reduction <maximumf>, %16, %cst_14 [1] : vector<8x128xf32> to vector<8xf32>
    %18 = vector.shape_cast %17 : vector<8xf32> to vector<8x1xf32>
    %19 = vector.broadcast %18 : vector<8x1xf32> to vector<8x128xf32>
    %20 = arith.subf %16, %19 : vector<8x128xf32>
    %21 = math.exp %20 : vector<8x128xf32>
    %cst_15 = arith.constant dense<0.000000e+00> : vector<8xf32>
    %22 = vector.multi_reduction <add>, %21, %cst_15 [1] : vector<8x128xf32> to vector<8xf32>
    %23 = vector.shape_cast %22 : vector<8xf32> to vector<8x1xf32>
    %24 = tpu.reciprocal %23 {approx = true} : vector<8x1xf32> -> vector<8x1xf32>
    %25 = vector.broadcast %24 : vector<8x1xf32> to vector<8x128xf32>
    %26 = arith.mulf %21, %25 : vector<8x128xf32>
    %c0_16 = arith.constant 0 : index
    %c0_17 = arith.constant 0 : index
    %27 = vector.load %arg11[%c0_16, %c0_17] : memref<8x128xf32, #tpu.memory_space<vmem>>, vector<8x128xf32>
    tpu.vector_store %arg11[%c0_16, %c0_17], %26 {strides = array<i32>} : memref<8x128xf32, #tpu.memory_space<vmem>>, vector<8x128xf32>,
    %c0_18 = arith.constant 0 : index
    %c0_19 = arith.constant 0 : index
    %28 = vector.load %arg8[%c0_18, %c0_19] : memref<128x128xf32, #tpu.memory_space<vmem>>, vector<128x128xf32>
    %cst_20 = arith.constant dense<0.000000e+00> : vector<8x128xf32>
    %29 = tpu.matmul %7, %28, %cst_20 {dimension_numbers = #tpu.dot_dimension_numbers<[1], [0], [0], [1], [0, 0, 1, 1], [], []>} : vector<8x128xf32>, vector<128x128xf32>, vector<8x128xf32> -> vector<8x128xf32>
    %c0_21 = arith.constant 0 : index
    %c0_22 = arith.constant 0 : index
    %30 = vector.load %arg2[%c0_21, %c0_22] : memref<8x8xf32, #tpu.memory_space<vmem>>, vector<8x8xf32>
    %c0_23 = arith.constant 0 : index
    %c0_24 = arith.constant 0 : index
    %31 = vector.load %arg9[%c0_23, %c0_24] : memref<8x128xf32, #tpu.memory_space<vmem>>, vector<8x128xf32>
    %cst_25 = arith.constant dense<0.000000e+00> : vector<8x128xf32>
    %32 = tpu.matmul %30, %31, %cst_25 {dimension_numbers = #tpu.dot_dimension_numbers<[1], [0], [0], [1], [0, 0, 1, 1], [], []>} : vector<8x8xf32>, vector<8x128xf32>, vector<8x128xf32> -> vector<8x128xf32>
    %33 = arith.addf %29, %32 : vector<8x128xf32>
    %c0_26 = arith.constant 0 : index
    %c0_27 = arith.constant 0 : index
    %34 = vector.load %arg10[%c0_26, %c0_27] : memref<1x128xf32, #tpu.memory_space<vmem>>, vector<1x128xf32>
    %35 = vector.broadcast %34 : vector<1x128xf32> to vector<8x128xf32>
    %36 = arith.addf %33, %35 : vector<8x128xf32>
    %c0_28 = arith.constant 0 : index
    %c0_29 = arith.constant 0 : index
    %37 = vector.load %arg12[%c0_28, %c0_29] : memref<8x128xf32, #tpu.memory_space<vmem>>, vector<8x128xf32>
    tpu.vector_store %arg12[%c0_28, %c0_29], %36 {strides = array<i32>} : memref<8x128xf32, #tpu.memory_space<vmem>>, vector<8x128xf32>,
    return
  }
  func.func @transform_0(%arg0: i32) -> (i32, i32, i32) {
    %c0_i32 = arith.constant 0 : i32
    %c0_i32_0 = arith.constant 0 : i32
    %c0_i32_1 = arith.constant 0 : i32
    return %c0_i32, %arg0, %c0_i32_0 : i32, i32, i32
  }
  func.func @transform_1(%arg0: i32) -> (i32, i32) {
    %c0_i32 = arith.constant 0 : i32
    %c0_i32_0 = arith.constant 0 : i32
    return %arg0, %c0_i32 : i32, i32
  }
  func.func @transform_2(%arg0: i32) -> (i32, i32) {
    %c0_i32 = arith.constant 0 : i32
    %c0_i32_0 = arith.constant 0 : i32
    %c0_i32_1 = arith.constant 0 : i32
    return %c0_i32, %c0_i32_0 : i32, i32
  }
  func.func @transform_3(%arg0: i32) -> (i32, i32) {
    %c0_i32 = arith.constant 0 : i32
    %c0_i32_0 = arith.constant 0 : i32
    %c0_i32_1 = arith.constant 0 : i32
    return %c0_i32, %c0_i32_0 : i32, i32
  }
  func.func @transform_4(%arg0: i32) -> (i32, i32) {
    %c0_i32 = arith.constant 0 : i32
    %c0_i32_0 = arith.constant 0 : i32
    %c0_i32_1 = arith.constant 0 : i32
    return %c0_i32, %c0_i32_0 : i32, i32
  }
  func.func @transform_5(%arg0: i32) -> (i32, i32) {
    %c0_i32 = arith.constant 0 : i32
    %c0_i32_0 = arith.constant 0 : i32
    %c0_i32_1 = arith.constant 0 : i32
    return %c0_i32, %c0_i32_0 : i32, i32
  }
  func.func @transform_6(%arg0: i32) -> (i32, i32) {
    %c0_i32 = arith.constant 0 : i32
    %c0_i32_0 = arith.constant 0 : i32
    %c0_i32_1 = arith.constant 0 : i32
    return %c0_i32, %c0_i32_0 : i32, i32
  }
  func.func @transform_7(%arg0: i32) -> (i32, i32) {
    %c0_i32 = arith.constant 0 : i32
    %c0_i32_0 = arith.constant 0 : i32
    %c0_i32_1 = arith.constant 0 : i32
    return %c0_i32, %c0_i32_0 : i32, i32
  }
  func.func @transform_8(%arg0: i32) -> (i32, i32) {
    %c0_i32 = arith.constant 0 : i32
    %c0_i32_0 = arith.constant 0 : i32
    %c0_i32_1 = arith.constant 0 : i32
    return %c0_i32, %c0_i32_0 : i32, i32
  }
  func.func @transform_9(%arg0: i32) -> (i32, i32) {
    %c0_i32 = arith.constant 0 : i32
    %c0_i32_0 = arith.constant 0 : i32
    %c0_i32_1 = arith.constant 0 : i32
    return %c0_i32, %c0_i32_0 : i32, i32
  }
  func.func @transform_10(%arg0: i32) -> (i32, i32) {
    %c0_i32 = arith.constant 0 : i32
    %c0_i32_0 = arith.constant 0 : i32
    return %arg0, %c0_i32 : i32, i32
  }
  func.func @transform_11(%arg0: i32) -> (i32, i32) {
    %c0_i32 = arith.constant 0 : i32
    %c0_i32_0 = arith.constant 0 : i32
    return %arg0, %c0_i32 : i32, i32
  }
}

</mosaic_0001>

<llo_original>
// kernel: tpu_custom_call.1
$region0: #{tpu_custom_call.1}
  #allocation0 [shape = 'u32[]', space=smem, size = 0x4, offset = 0x4, fixed_abs, tag = 'smem constant byte address 0x4 - core index']
  #allocation1 [shape = 'u32[72,128]{1,0:T(1,128)}', space=vmem, size = 0x9000, scoped, tag = 'internal scratch']
  %s0 = inlined_call_operand.hbm [shape: f32[2,8,32], index: 0, kind: input, shape index: {}]
  %s1 = inlined_call_operand.hbm [shape: f32[8,8], index: 1, kind: input, shape index: {}]
  %s2 = inlined_call_operand.hbm [shape: f32[32,128], index: 2, kind: input, shape index: {}]
  %s3 = inlined_call_operand.vmem [shape: f32[1,128], index: 3, kind: input, shape index: {}]
  %s4 = inlined_call_operand.hbm [shape: f32[128,128], index: 4, kind: input, shape index: {}]
  %s5 = inlined_call_operand.hbm [shape: f32[128,128], index: 5, kind: input, shape index: {}]
  %s6 = inlined_call_operand.vmem [shape: f32[1,128], index: 6, kind: input, shape index: {}]
  %s7 = inlined_call_operand.hbm [shape: f32[128,128], index: 7, kind: input, shape index: {}]
  %s8 = inlined_call_operand.hbm [shape: f32[8,128], index: 8, kind: input, shape index: {}]
  %s9 = inlined_call_operand.vmem [shape: f32[1,128], index: 9, kind: input, shape index: {}]
  %s10 = inlined_call_operand.hbm [shape: f32[8,128], index: 10, kind: output, shape index: {0}]
  %s11 = inlined_call_operand.hbm [shape: f32[8,128], index: 11, kind: output, shape index: {1}]
  %12 = xla_tuple %s10, %s11
  %s13 = sld [smem:[#allocation0]]
  $region86: #{tpu_custom_call.1} parent=0
    _
  %s15 = ssub.s32 1, %s13
  %s16 = scalar_select 0, %s15, %s13
  $region1: #{tpu_custom_call.1} parent=0
    #allocation2 [shape = 'u8[8192]{0}', space=vmem, size = 0x2000, scoped, tag = 'input window, operand 0, single buffered']
    #allocation3 [shape = 's32[1]{0}', space=sflag, size = 0x4, scoped, tag = 'scoped memory for tpu_custom_call.1']
    #allocation4 [shape = 's32[1]{0}', space=sflag, size = 0x4, scoped, tag = 'scoped memory for tpu_custom_call.1']
    #allocation5 [shape = 'u8[4096]{0}', space=vmem, size = 0x1000, scoped, tag = 'input window, operand 1, single buffered']
    #allocation6 [shape = 's32[1]{0}', space=sflag, size = 0x4, scoped, tag = 'scoped memory for tpu_custom_call.1']
    #allocation7 [shape = 'u8[16384]{0}', space=vmem, size = 0x4000, scoped, tag = 'input window, operand 2, single buffered']
    #allocation8 [shape = 'u8[65536]{0}', space=vmem, size = 0x10000, scoped, tag = 'input window, operand 4, single buffered']
    #allocation9 [shape = 's32[1]{0}', space=sflag, size = 0x4, scoped, tag = 'scoped memory for tpu_custom_call.1']
    #allocation10 [shape = 'u8[65536]{0}', space=vmem, size = 0x10000, scoped, tag = 'input window, operand 5, single buffered']
    #allocation11 [shape = 'u8[65536]{0}', space=vmem, size = 0x10000, scoped, tag = 'input window, operand 7, single buffered']
    #allocation12 [shape = 's32[1]{0}', space=sflag, size = 0x4, scoped, tag = 'scoped memory for tpu_custom_call.1']
    #allocation13 [shape = 'u8[4096]{0}', space=vmem, size = 0x1000, scoped, tag = 'input window, operand 8, single buffered']
    #allocation14 [shape = 'u8[4096]{0}', space=vmem, size = 0x1000, scoped, tag = 'output window, operand 0, single buffered']
    #allocation15 [shape = 'u8[4096]{0}', space=vmem, size = 0x1000, scoped, tag = 'output window, operand 1, single buffered']
    #allocation16 [shape = 's32[1]{0}', space=sflag, size = 0x4, scoped, tag = 'scoped memory for tpu_custom_call.1']
    %17 = vsyncpa [#allocation3], 0
    %18 = vsyncpa [#allocation6], 0
    %19 = vsyncpa [#allocation9], 0
    %20 = vsyncpa [#allocation12], 0
    %21 = vsyncpa [#allocation4], 0
    %22 = vsyncpa [#allocation16], 0
    // Predicated region
    $region2: #{tpu_custom_call.1} parent=1 // pred_check
      _
    $region3: #{tpu_custom_call.1} parent=1 // pred_check_branch
      %24 = sbr.rel (0) target = $region5
    $region4: #{tpu_custom_call.1} parent=1 // pred_region
      %26 = vsyncadd [#allocation3], 0
      %s27 = sshll.u32 %s0, 4
      %s28 = int_to_ptr.hbm [resolvable:$true] %s27
      %s29 = sshll.u32 [#allocation2], 4
      %s30 = int_to_ptr.vmem [resolvable:$true] %s29
      %35 = dma.hbm_to_vmem [thread:$0]  %s28, 256, %s30, [#allocation3], 128, 128, 8
    $region5: #{tpu_custom_call.1} parent=1 // pred_fallthru
      _
    // Predicated region
    $region6: #{tpu_custom_call.1} parent=1 // pred_check
      _
    $region7: #{tpu_custom_call.1} parent=1 // pred_check_branch
      %37 = sbr.rel (0) target = $region9
    $region8: #{tpu_custom_call.1} parent=1 // pred_region
      %39 = vsyncadd [#allocation6], 0
      %s41 = sshll.u32 %s1, 4
      %s42 = int_to_ptr.hbm [resolvable:$true] %s41
      %s43 = sshll.u32 [#allocation5], 4
      %s44 = int_to_ptr.vmem [resolvable:$true] %s43
      %46 = dma.hbm_to_vmem [thread:$0]  %s42, 128, %s44, [#allocation6]
    $region9: #{tpu_custom_call.1} parent=1 // pred_fallthru
      _
    // Predicated region
    $region10: #{tpu_custom_call.1} parent=1 // pred_check
      _
    $region11: #{tpu_custom_call.1} parent=1 // pred_check_branch
      %48 = sbr.rel (0) target = $region13
    $region12: #{tpu_custom_call.1} parent=1 // pred_region
      %50 = vsyncadd [#allocation6], 0
      %s51 = sshll.u32 %s2, 4
      %s52 = int_to_ptr.hbm [resolvable:$true] %s51
      %s53 = sshll.u32 [#allocation7], 4
      %s54 = int_to_ptr.vmem [resolvable:$true] %s53
      %59 = dma.hbm_to_vmem [thread:$0]  %s52, 512, %s54, [#allocation6], 128, 128, 8
    $region13: #{tpu_custom_call.1} parent=1 // pred_fallthru
      _
    // Predicated region
    $region14: #{tpu_custom_call.1} parent=1 // pred_check
      _
    $region15: #{tpu_custom_call.1} parent=1 // pred_check_branch
      %61 = sbr.rel (0) target = $region17
    $region16: #{tpu_custom_call.1} parent=1 // pred_region
      _
    $region17: #{tpu_custom_call.1} parent=1 // pred_fallthru
      _
    // Predicated region
    $region18: #{tpu_custom_call.1} parent=1 // pred_check
      _
    $region19: #{tpu_custom_call.1} parent=1 // pred_check_branch
      %63 = sbr.rel (0) target = $region21
    $region20: #{tpu_custom_call.1} parent=1 // pred_region
      %65 = vsyncadd [#allocation9], 0
      %s66 = sshll.u32 %s4, 4
      %s67 = int_to_ptr.hbm [resolvable:$true] %s66
      %s68 = sshll.u32 [#allocation8], 4
      %s69 = int_to_ptr.vmem [resolvable:$true] %s68
      %74 = dma.hbm_to_vmem [thread:$0]  %s67, 2048, %s69, [#allocation9], 128, 128, 8
    $region21: #{tpu_custom_call.1} parent=1 // pred_fallthru
      _
    // Predicated region
    $region22: #{tpu_custom_call.1} parent=1 // pred_check
      _
    $region23: #{tpu_custom_call.1} parent=1 // pred_check_branch
      %76 = sbr.rel (0) target = $region25
    $region24: #{tpu_custom_call.1} parent=1 // pred_region
      %78 = vsyncadd [#allocation9], 0
      %s79 = sshll.u32 %s5, 4
      %s80 = int_to_ptr.hbm [resolvable:$true] %s79
      %s81 = sshll.u32 [#allocation10], 4
      %s82 = int_to_ptr.vmem [resolvable:$true] %s81
      %87 = dma.hbm_to_vmem [thread:$0]  %s80, 2048, %s82, [#allocation9], 128, 128, 8
    $region25: #{tpu_custom_call.1} parent=1 // pred_fallthru
      _
    // Predicated region
    $region26: #{tpu_custom_call.1} parent=1 // pred_check
      _
    $region27: #{tpu_custom_call.1} parent=1 // pred_check_branch
      %89 = sbr.rel (0) target = $region29
    $region28: #{tpu_custom_call.1} parent=1 // pred_region
      _
    $region29: #{tpu_custom_call.1} parent=1 // pred_fallthru
      _
    // Predicated region
    $region30: #{tpu_custom_call.1} parent=1 // pred_check
      _
    $region31: #{tpu_custom_call.1} parent=1 // pred_check_branch
      %91 = sbr.rel (0) target = $region33
    $region32: #{tpu_custom_call.1} parent=1 // pred_region
      %93 = vsyncadd [#allocation12], 0
      %s94 = sshll.u32 %s7, 4
      %s95 = int_to_ptr.hbm [resolvable:$true] %s94
      %s96 = sshll.u32 [#allocation11], 4
      %s97 = int_to_ptr.vmem [resolvable:$true] %s96
      %102 = dma.hbm_to_vmem [thread:$0]  %s95, 2048, %s97, [#allocation12], 128, 128, 8
    $region33: #{tpu_custom_call.1} parent=1 // pred_fallthru
      _
    // Predicated region
    $region34: #{tpu_custom_call.1} parent=1 // pred_check
      _
    $region35: #{tpu_custom_call.1} parent=1 // pred_check_branch
      %104 = sbr.rel (0) target = $region37
    $region36: #{tpu_custom_call.1} parent=1 // pred_region
      %106 = vsyncadd [#allocation12], 0
      %s108 = sshll.u32 %s8, 4
      %s109 = int_to_ptr.hbm [resolvable:$true] %s108
      %s110 = sshll.u32 [#allocation13], 4
      %s111 = int_to_ptr.vmem [resolvable:$true] %s110
      %113 = dma.hbm_to_vmem [thread:$0]  %s109, 128, %s111, [#allocation12]
    $region37: #{tpu_custom_call.1} parent=1 // pred_fallthru
      _
    // Predicated region
    $region38: #{tpu_custom_call.1} parent=1 // pred_check
      _
    $region39: #{tpu_custom_call.1} parent=1 // pred_check_branch
      %115 = sbr.rel (0) target = $region41
    $region40: #{tpu_custom_call.1} parent=1 // pred_region
      _
    $region41: #{tpu_custom_call.1} parent=1 // pred_fallthru
      _
    // Predicated region
    $region42: #{tpu_custom_call.1} parent=1 // pred_check
      _
    $region43: #{tpu_custom_call.1} parent=1 // pred_check_branch
      %117 = sbr.rel (0) target = $region45
    $region44: #{tpu_custom_call.1} parent=1 // pred_region
      %119 = dma.done [#allocation3], 256
    $region45: #{tpu_custom_call.1} parent=1 // pred_fallthru
      _
    // Predicated region
    $region46: #{tpu_custom_call.1} parent=1 // pred_check
      _
    $region47: #{tpu_custom_call.1} parent=1 // pred_check_branch
      %121 = sbr.rel (0) target = $region49
    $region48: #{tpu_custom_call.1} parent=1 // pred_region
      %123 = dma.done [#allocation6], 128
    $region49: #{tpu_custom_call.1} parent=1 // pred_fallthru
      _
    // Predicated region
    $region50: #{tpu_custom_call.1} parent=1 // pred_check
      _
    $region51: #{tpu_custom_call.1} parent=1 // pred_check_branch
      %125 = sbr.rel (0) target = $region53
    $region52: #{tpu_custom_call.1} parent=1 // pred_region
      %127 = dma.done [#allocation6], 512
    $region53: #{tpu_custom_call.1} parent=1 // pred_fallthru
      _
    // Predicated region
    $region54: #{tpu_custom_call.1} parent=1 // pred_check
      _
    $region55: #{tpu_custom_call.1} parent=1 // pred_check_branch
      %129 = sbr.rel (0) target = $region57
    $region56: #{tpu_custom_call.1} parent=1 // pred_region
      %131 = dma.done [#allocation9], 2048
    $region57: #{tpu_custom_call.1} parent=1 // pred_fallthru
      _
    // Predicated region
    $region58: #{tpu_custom_call.1} parent=1 // pred_check
      _
    $region59: #{tpu_custom_call.1} parent=1 // pred_check_branch
      %133 = sbr.rel (0) target = $region61
    $region60: #{tpu_custom_call.1} parent=1 // pred_region
      %135 = dma.done [#allocation9], 2048
    $region61: #{tpu_custom_call.1} parent=1 // pred_fallthru
      _
    // Predicated region
    $region62: #{tpu_custom_call.1} parent=1 // pred_check
      _
    $region63: #{tpu_custom_call.1} parent=1 // pred_check_branch
      %137 = sbr.rel (0) target = $region65
    $region64: #{tpu_custom_call.1} parent=1 // pred_region
      %139 = dma.done [#allocation12], 2048
    $region65: #{tpu_custom_call.1} parent=1 // pred_fallthru
      _
    // Predicated region
    $region66: #{tpu_custom_call.1} parent=1 // pred_check
      _
    $region67: #{tpu_custom_call.1} parent=1 // pred_check_branch
      %141 = sbr.rel (0) target = $region69
    $region68: #{tpu_custom_call.1} parent=1 // pred_region
      %143 = dma.done [#allocation12], 128
    $region69: #{tpu_custom_call.1} parent=1 // pred_fallthru
      _
    %v144 = vld [vmem:[#allocation2] sm:$0xff]
    %v145 = vld [vmem:[#allocation2 + $0x8] sm:$0xff]
    %v146 = vld [vmem:[#allocation7] sm:$0xff]
    %v147 = vld [vmem:[#allocation7 + $0x8] sm:$0xff]
    %v148 = vld [vmem:[#allocation7 + $0x10] sm:$0xff]
    %v149 = vld [vmem:[#allocation7 + $0x18] sm:$0xff]
    %v150 = vld [vmem:[%s3] sm:$0x1]
    %v152 = vperm.slane %v150, 0
    %vm154 = vcmask 261120
    %v156 = vsel %vm154, %v144, 0
    %v159 = vsel %vm154, %v145, 0
    %161 = vmatpush.msra.mxu0 0.0
    %162 = vmatpush.msra.mxu0 0.0
    %163 = vmatpush.msra.mxu0 0.0
    %164 = vmatpush.msra.mxu0 0.0
    %165 = vmatpush.msra.mxu0 0.0
    %166 = vmatpush.msra.mxu0 0.0
    %167 = vmatpush.msra.mxu0 0.0
    %168 = vmatpush.msra.mxu0 0.0
    %169 = vmatpush.msra.mxu0 0.0
    %170 = vmatpush.msra.mxu0 0.0
    %171 = vmatpush.msra.mxu0 0.0
    %172 = vmatpush.msra.mxu0 0.0
    %173 = vmatpush.msra.mxu0 %v149
    %174 = vmatpush.msra.mxu0 %v148
    %175 = vmatpush.msra.mxu0 %v147
    %176 = vmatpush.msra.mxu0 %v146
    %177 = vmatmul.f32.gmra.mxu0 %v156
    %v178 = vpop.f32.mrf.mxu0
    %v179 = vadd.f32 %v152, %v178
    %180 = vmatmul.f32.gmra.mxu0 %v159
    %v181 = vpop.f32.mrf.mxu0
    %v182 = vadd.f32 %v152, %v181
    %183 = vdwg.mxu0
    %v184 = vld [vmem:[#allocation8] sm:$0xff]
    %v185 = vld [vmem:[#allocation8 + $0x8] sm:$0xff]
    %v186 = vld [vmem:[#allocation8 + $0x10] sm:$0xff]
    %v187 = vld [vmem:[#allocation8 + $0x18] sm:$0xff]
    %v188 = vld [vmem:[#allocation8 + $0x20] sm:$0xff]
    %v189 = vld [vmem:[#allocation8 + $0x28] sm:$0xff]
    %v190 = vld [vmem:[#allocation8 + $0x30] sm:$0xff]
    %v191 = vld [vmem:[#allocation8 + $0x38] sm:$0xff]
    %v192 = vld [vmem:[#allocation8 + $0x40] sm:$0xff]
    %v193 = vld [vmem:[#allocation8 + $0x48] sm:$0xff]
    %v194 = vld [vmem:[#allocation8 + $0x50] sm:$0xff]
    %v195 = vld [vmem:[#allocation8 + $0x58] sm:$0xff]
    %v196 = vld [vmem:[#allocation8 + $0x60] sm:$0xff]
    %v197 = vld [vmem:[#allocation8 + $0x68] sm:$0xff]
    %v198 = vld [vmem:[#allocation8 + $0x70] sm:$0xff]
    %v199 = vld [vmem:[#allocation8 + $0x78] sm:$0xff]
    %v200 = vld [vmem:[#allocation10] sm:$0xff]
    %v201 = vld [vmem:[#allocation10 + $0x8] sm:$0xff]
    %v202 = vld [vmem:[#allocation10 + $0x10] sm:$0xff]
    %v203 = vld [vmem:[#allocation10 + $0x18] sm:$0xff]
    %v204 = vld [vmem:[#allocation10 + $0x20] sm:$0xff]
    %v205 = vld [vmem:[#allocation10 + $0x28] sm:$0xff]
    %v206 = vld [vmem:[#allocation10 + $0x30] sm:$0xff]
    %v207 = vld [vmem:[#allocation10 + $0x38] sm:$0xff]
    %v208 = vld [vmem:[#allocation10 + $0x40] sm:$0xff]
    %v209 = vld [vmem:[#allocation10 + $0x48] sm:$0xff]
    %v210 = vld [vmem:[#allocation10 + $0x50] sm:$0xff]
    %v211 = vld [vmem:[#allocation10 + $0x58] sm:$0xff]
    %v212 = vld [vmem:[#allocation10 + $0x60] sm:$0xff]
    %v213 = vld [vmem:[#allocation10 + $0x68] sm:$0xff]
    %v214 = vld [vmem:[#allocation10 + $0x70] sm:$0xff]
    %v215 = vld [vmem:[#allocation10 + $0x78] sm:$0xff]
    %216 = vmatpush.msra.mxu0 %v215
    %217 = vmatpush.msra.mxu0 %v214
    %218 = vmatpush.msra.mxu0 %v213
    %219 = vmatpush.msra.mxu0 %v212
    %220 = vmatpush.msra.mxu0 %v211
    %221 = vmatpush.msra.mxu0 %v210
    %222 = vmatpush.msra.mxu0 %v209
    %223 = vmatpush.msra.mxu0 %v208
    %224 = vmatpush.msra.mxu0 %v207
    %225 = vmatpush.msra.mxu0 %v206
    %226 = vmatpush.msra.mxu0 %v205
    %227 = vmatpush.msra.mxu0 %v204
    %228 = vmatpush.msra.mxu0 %v203
    %229 = vmatpush.msra.mxu0 %v202
    %230 = vmatpush.msra.mxu0 %v201
    %231 = vmatpush.msra.mxu0 %v200
    %232 = vmatmul.f32.gmra.mxu0 %v182
    %v233 = vpop.f32.mrf.mxu0
    %v234 = vadd.f32 0.0, %v233
    %235 = vdwg.mxu0
    %236 = vmatpush.msra.mxu0 %v199
    %237 = vmatpush.msra.mxu0 %v198
    %238 = vmatpush.msra.mxu0 %v197
    %239 = vmatpush.msra.mxu0 %v196
    %240 = vmatpush.msra.mxu0 %v195
    %241 = vmatpush.msra.mxu0 %v194
    %242 = vmatpush.msra.mxu0 %v193
    %243 = vmatpush.msra.mxu0 %v192
    %244 = vmatpush.msra.mxu0 %v191
    %245 = vmatpush.msra.mxu0 %v190
    %246 = vmatpush.msra.mxu0 %v189
    %247 = vmatpush.msra.mxu0 %v188
    %248 = vmatpush.msra.mxu0 %v187
    %249 = vmatpush.msra.mxu0 %v186
    %250 = vmatpush.msra.mxu0 %v185
    %251 = vmatpush.msra.mxu0 %v184
    %252 = vmatmul.f32.gmra.mxu0 %v179
    %v253 = vpop.f32.mrf.mxu0
    %v254 = vadd.f32 %v234, %v253
    %255 = vdwg.mxu0
    %v256 = vld [vmem:[%s6] sm:$0x1]
    %v258 = vperm.slane %v256, 0
    %v260 = vadd.f32 %v254, %v258
    %261 = vmax.xlane.f32.xlu0 %v260
    %v262 = vpop.xlane.xlu0 %261
    %v263 = vsub.f32 %v260, %v262
    %v264 = vmul.f32 %v263, 1.442695
    %v265 = vpow.pop %v264
    %266 = vadd.xlane.f32.xlu0 %v265
    %v267 = vpop.xlane.xlu0 %266
    %v268 = vrcp.pop %v267
    %v269 = vmul.f32 %v265, %v268
    %270 = vst [vmem:[#allocation14] sm:$0xff] %v269
    %v271 = vld [vmem:[#allocation11] sm:$0xff]
    %v272 = vld [vmem:[#allocation11 + $0x8] sm:$0xff]
    %v273 = vld [vmem:[#allocation11 + $0x10] sm:$0xff]
    %v274 = vld [vmem:[#allocation11 + $0x18] sm:$0xff]
    %v275 = vld [vmem:[#allocation11 + $0x20] sm:$0xff]
    %v276 = vld [vmem:[#allocation11 + $0x28] sm:$0xff]
    %v277 = vld [vmem:[#allocation11 + $0x30] sm:$0xff]
    %v278 = vld [vmem:[#allocation11 + $0x38] sm:$0xff]
    %v279 = vld [vmem:[#allocation11 + $0x40] sm:$0xff]
    %v280 = vld [vmem:[#allocation11 + $0x48] sm:$0xff]
    %v281 = vld [vmem:[#allocation11 + $0x50] sm:$0xff]
    %v282 = vld [vmem:[#allocation11 + $0x58] sm:$0xff]
    %v283 = vld [vmem:[#allocation11 + $0x60] sm:$0xff]
    %v284 = vld [vmem:[#allocation11 + $0x68] sm:$0xff]
    %v285 = vld [vmem:[#allocation11 + $0x70] sm:$0xff]
    %v286 = vld [vmem:[#allocation11 + $0x78] sm:$0xff]
    %v287 = vld [vmem:[#allocation5] sm:$0xff]
    %v288 = vld [vmem:[#allocation13] sm:$0xff]
    %vm289 = vcmask 64512
    %v291 = vsel %vm289, %v287, 0
    %293 = vmatpush.msra.mxu0 0.0
    %294 = vmatpush.msra.mxu0 0.0
    %295 = vmatpush.msra.mxu0 0.0
    %296 = vmatpush.msra.mxu0 0.0
    %297 = vmatpush.msra.mxu0 0.0
    %298 = vmatpush.msra.mxu0 0.0
    %299 = vmatpush.msra.mxu0 0.0
    %300 = vmatpush.msra.mxu0 0.0
    %301 = vmatpush.msra.mxu0 0.0
    %302 = vmatpush.msra.mxu0 0.0
    %303 = vmatpush.msra.mxu0 0.0
    %304 = vmatpush.msra.mxu0 0.0
    %305 = vmatpush.msra.mxu0 0.0
    %306 = vmatpush.msra.mxu0 0.0
    %307 = vmatpush.msra.mxu0 0.0
    %308 = vmatpush.msra.mxu0 %v288
    %309 = vmatmul.f32.gmra.mxu0 %v291
    %v310 = vpop.f32.mrf.mxu0
    %v311 = vadd.f32 0.0, %v310
    %312 = vdwg.mxu0
    %313 = vmatpush.msra.mxu0 %v286
    %314 = vmatpush.msra.mxu0 %v285
    %315 = vmatpush.msra.mxu0 %v284
    %316 = vmatpush.msra.mxu0 %v283
    %317 = vmatpush.msra.mxu0 %v282
    %318 = vmatpush.msra.mxu0 %v281
    %319 = vmatpush.msra.mxu0 %v280
    %320 = vmatpush.msra.mxu0 %v279
    %321 = vmatpush.msra.mxu0 %v278
    %322 = vmatpush.msra.mxu0 %v277
    %323 = vmatpush.msra.mxu0 %v276
    %324 = vmatpush.msra.mxu0 %v275
    %325 = vmatpush.msra.mxu0 %v274
    %326 = vmatpush.msra.mxu0 %v273
    %327 = vmatpush.msra.mxu0 %v272
    %328 = vmatpush.msra.mxu0 %v271
    %329 = vmatmul.f32.gmra.mxu0 %v179
    %v330 = vpop.f32.mrf.mxu0
    %v331 = vadd.f32 %v311, %v330
    %332 = vdwg.mxu0
    %v333 = vld [vmem:[%s9] sm:$0x1]
    %v335 = vperm.slane %v333, 0
    %v337 = vadd.f32 %v331, %v335
    %338 = vst [vmem:[#allocation15] sm:$0xff] %v337
    // Predicated region
    $region70: #{tpu_custom_call.1} parent=1 // pred_check
      _
    $region71: #{tpu_custom_call.1} parent=1 // pred_check_branch
      %340 = sbr.rel (0) target = $region73
    $region72: #{tpu_custom_call.1} parent=1 // pred_region
      %342 = vsyncadd [#allocation4], 0
      %s344 = sshll.u32 [#allocation14], 4
      %s345 = int_to_ptr.vmem [resolvable:$true] %s344
      %s346 = sshll.u32 %s10, 4
      %s347 = int_to_ptr.hbm [resolvable:$true] %s346
      %349 = dma.vmem_to_hbm [thread:$0]  %s345, 128, %s347, [#allocation4]
    $region73: #{tpu_custom_call.1} parent=1 // pred_fallthru
      _
    // Predicated region
    $region74: #{tpu_custom_call.1} parent=1 // pred_check
      _
    $region75: #{tpu_custom_call.1} parent=1 // pred_check_branch
      %351 = sbr.rel (0) target = $region77
    $region76: #{tpu_custom_call.1} parent=1 // pred_region
      %353 = vsyncadd [#allocation16], 0
      %s355 = sshll.u32 [#allocation15], 4
      %s356 = int_to_ptr.vmem [resolvable:$true] %s355
      %s357 = sshll.u32 %s11, 4
      %s358 = int_to_ptr.hbm [resolvable:$true] %s357
      %360 = dma.vmem_to_hbm [thread:$0]  %s356, 128, %s358, [#allocation16]
    $region77: #{tpu_custom_call.1} parent=1 // pred_fallthru
      _
    // Predicated region
    $region78: #{tpu_custom_call.1} parent=1 // pred_check
      _
    $region79: #{tpu_custom_call.1} parent=1 // pred_check_branch
      %362 = sbr.rel (0) target = $region81
    $region80: #{tpu_custom_call.1} parent=1 // pred_region
      %364 = dma.done [#allocation4], 128
    $region81: #{tpu_custom_call.1} parent=1 // pred_fallthru
      _
    // Predicated region
    $region82: #{tpu_custom_call.1} parent=1 // pred_check
      _
    $region83: #{tpu_custom_call.1} parent=1 // pred_check_branch
      %366 = sbr.rel (0) target = $region85
    $region84: #{tpu_custom_call.1} parent=1 // pred_region
      %368 = dma.done [#allocation16], 128
    $region85: #{tpu_custom_call.1} parent=1 // pred_fallthru
      _
    %369 = vsyncpa [#allocation3], 1
    %370 = vsyncpa [#allocation6], 1
    %371 = vsyncpa [#allocation9], 1
    %372 = vsyncpa [#allocation12], 1
    %373 = vsyncpa [#allocation4], 1
    %374 = vsyncpa [#allocation16], 1

</llo_original>
